<compile_context>
chip_gen: v7x
topology: tpu7x:2x2x1
jax: 0.10.0
libtpu: 0.0.40
codegen_flags: <defaults>
</compile_context>

<pallas_src>
import functools

import jax
import jax.numpy as jnp
from jax.experimental import pallas as pl
from jax.experimental.pallas import tpu as pltpu


_LANE = 128
_VMEM_TILE_BUDGET = 40 * 1024 * 1024   # working-set budget for tile sizing
_VMEM_LIMIT_CAP = 56 * 1024 * 1024     # stay under v7x's 64 MiB physical VMEM


def _round_up(v, m):
    return (v + m - 1) // m * m


def _pick_row_tile(n, per_row_bytes, budget_bytes):
    """Largest power-of-two row tile (>=8) dividing n that fits the budget."""
    for t in (1024, 512, 256, 128, 64, 32, 16, 8):
        if t <= n and n % t == 0 and t * per_row_bytes <= budget_bytes:
            return t
    return n  # tiny / odd n: whole axis (block == full dim is always legal)


def _vmem_limit(estimated_bytes):
    """Explicit scoped-VMEM limit: generous headroom, capped for v7x."""
    want = estimated_bytes + estimated_bytes // 2 + (4 << 20)
    return int(min(max(want, 16 << 20), _VMEM_LIMIT_CAP))


# ---------------------------------------------------------------------------
# Stage 1: XW = dropout_sparse(x) @ W     (bf16 result, f32 accumulate)
# ---------------------------------------------------------------------------
def _xw_kernel(seed_ref, x_ref, w_ref, xw_ref, *, keep_prob):
    # seed_ref : SMEM (1,) int32
    # x_ref    : VMEM (tile_n, Din)     row tile of node features
    # w_ref    : VMEM (Din, Dout_pad)   full weights (zero-padded columns)
    # xw_ref   : VMEM (tile_n, Dout_pad) bf16 output row tile
    x = x_ref[...].astype(jnp.float32)
    if keep_prob < 1.0:
        # DropoutSparse: drop each stored nonzero w.p. (1 - keep_prob), scale
        # survivors by 1/keep_prob.
        # TODO(synk): torch draws one Bernoulli per stored nonzero
        # (noise_shape=[nnz]); i.i.d. per-dense-element draws are equivalent in
        # distribution for the nonzero entries (zeros stay zero).
        pltpu.prng_seed(seed_ref[0] + pl.program_id(0))
        bits = pltpu.bitcast(pltpu.prng_random_bits(x.shape), jnp.int32)
        # bits uniform over int32 => P(bits < thresh) == keep_prob.
        thresh = jnp.int32(
            min(int(keep_prob * 4294967296.0) - 2147483648, 2147483647))
        keep = bits < thresh
        x = jnp.where(keep, x * (1.0 / keep_prob), 0.0)
    xw = jnp.dot(x, w_ref[...].astype(jnp.float32),
                 preferred_element_type=jnp.float32)
    xw_ref[...] = xw.astype(xw_ref.dtype)


# ---------------------------------------------------------------------------
# Stage 2: out = ReLU(adj @ XW)           (bf16 inputs, f32 accumulate)
# ---------------------------------------------------------------------------
def _aggregate_kernel(adj_ref, xw_ref, o_ref):
    # adj_ref : VMEM (tile_m, N)        bf16 adjacency row tile
    # xw_ref  : VMEM (N, Dout_pad)      bf16 XW, full (constant index map)
    # o_ref   : VMEM (tile_m, Dout_pad) f32 output row tile (lane-dense)
    h = jnp.dot(adj_ref[...], xw_ref[...], preferred_element_type=jnp.float32)
    o_ref[...] = jnp.maximum(h, 0.0).astype(o_ref.dtype)


def graph_convolution_sparse(x, w, adj, *, dropout=0.0, seed=0):
    """Dense-form GraphConvolutionSparse forward: ReLU(adj @ (dropout(x) @ W))."""
    n, din = x.shape
    dout = w.shape[1]
    assert adj.shape == (n, n)
    keep_prob = 1.0 - float(dropout)

    # Lane-dense outputs: pad Dout to a multiple of 128; padded columns are
    # zero through both matmuls and sliced off at the end.
    dout_p = _round_up(dout, _LANE)
    w_p = jnp.zeros((din, dout_p), jnp.float32).at[:, :dout].set(
        w.astype(jnp.float32))

    adj_bf16 = adj.astype(jnp.bfloat16)      # 0/1 entries are exact in bf16
    seed_arr = jnp.asarray([seed], dtype=jnp.int32)
    x_bytes = jnp.dtype(x.dtype).itemsize

    # ---- Stage 1: XW ------------------------------------------------------
    s1_fixed = 2 * din * dout_p * 4                       # W double buffer (f32)
    s1_per_row = 2 * din * x_bytes + 2 * dout_p * 2       # x + xw double buffers
    tile_n = _pick_row_tile(n, s1_per_row, _VMEM_TILE_BUDGET - s1_fixed)
    s1_total = s1_fixed + tile_n * s1_per_row

    xw = pl.pallas_call(
        functools.partial(_xw_kernel, keep_prob=keep_prob),
        out_shape=jax.ShapeDtypeStruct((n, dout_p), jnp.bfloat16),
        grid_spec=pltpu.PrefetchScalarGridSpec(
            num_scalar_prefetch=1,                        # seed -> SMEM
            grid=(n // tile_n,),
            in_specs=[
                pl.BlockSpec((tile_n, din), lambda i, seed: (i, 0)),   # x rows
                pl.BlockSpec((din, dout_p), lambda i, seed: (0, 0)),   # W (full)
            ],
            out_specs=pl.BlockSpec((tile_n, dout_p), lambda i, seed: (i, 0)),
        ),
        compiler_params=pltpu.CompilerParams(
            dimension_semantics=("parallel",),            # independent row tiles
            vmem_limit_bytes=_vmem_limit(s1_total),
        ),
    )(seed_arr, x, w_p)

    # ---- Stage 2: ReLU(adj @ XW) ------------------------------------------
    s2_fixed = 2 * n * dout_p * 2                         # XW double buffer (bf16)
    s2_per_row = 2 * n * 2 + 2 * dout_p * 4               # adj (bf16) + out (f32)
    tile_m = _pick_row_tile(n, s2_per_row, _VMEM_TILE_BUDGET - s2_fixed)
    s2_total = s2_fixed + tile_m * s2_per_row

    out_p = pl.pallas_call(
        _aggregate_kernel,
        out_shape=jax.ShapeDtypeStruct((n, dout_p), jnp.float32),
        grid_spec=pltpu.PrefetchScalarGridSpec(
            num_scalar_prefetch=0,
            grid=(n // tile_m,),
            in_specs=[
                pl.BlockSpec((tile_m, n), lambda i: (i, 0)),     # adj row tile
                pl.BlockSpec((n, dout_p), lambda i: (0, 0)),     # XW (full)
            ],
            out_specs=pl.BlockSpec((tile_m, dout_p), lambda i: (i, 0)),
        ),
        compiler_params=pltpu.CompilerParams(
            dimension_semantics=("parallel",),            # lets v7x use both TCs
            vmem_limit_bytes=_vmem_limit(s2_total),
        ),
    )(adj_bf16, xw)

    return out_p[:, :dout]


def weight_variable_glorot(key, input_dim, output_dim):
    """Deterministic Glorot-uniform init, matching weight_variable_glorot."""
    init_range = jnp.sqrt(6.0 / (input_dim + output_dim))
    return jax.random.uniform(key, (input_dim, output_dim),
                              minval=-init_range, maxval=init_range,
                              dtype=jnp.float32)


if __name__ == "__main__":
    key = jax.random.PRNGKey(0)
    k_x, k_adj, k_w, k_mask = jax.random.split(key, 4)

    N, DIN, DOUT = 128, 32, 16

    # Sparse node features (dense representation, ~80% zeros).
    x_dense = jax.random.normal(k_x, (N, DIN), dtype=jnp.float32)
    x_mask = (jax.random.uniform(k_mask, (N, DIN)) < 0.2).astype(jnp.float32)
    x = x_dense * x_mask

    # Sparse symmetric adjacency (dense representation).
    a = (jax.random.uniform(k_adj, (N, N)) < 0.05).astype(jnp.float32)
    adj = jnp.maximum(a, a.T)

    # Glorot-initialized weights (module __init__).
    w = weight_variable_glorot(k_w, DIN, DOUT)

    out = graph_convolution_sparse(x, w, adj, dropout=0.0, seed=0)
    out = jax.block_until_ready(out)

    # Reference (dropout=0.0 -> identity dropout, as in module defaults).
    # The kernel stores XW in bf16, so round the reference XW the same way and
    # compare with a bf16-appropriate tolerance.
    xw_ref = (x @ w).astype(jnp.bfloat16).astype(jnp.float32)
    ref = jnp.maximum(adj @ xw_ref, 0.0)
    ref_f32 = jnp.maximum(adj @ (x @ w), 0.0)

    assert out.shape == (N, DOUT)
    assert jnp.allclose(out, ref, atol=2e-2, rtol=2e-2)
    assert jnp.allclose(out, ref_f32, atol=5e-2, rtol=5e-2)

    print("KERNEL_OK")
</pallas_src>

<mosaic_0001>
module attributes {stable_mosaic.version = 11 : i64} {
  func.func @_xw_kernel(%arg0: i32, %arg1: memref<1xi32, #tpu.memory_space<smem>>, %arg2: memref<128x32xf32, #tpu.memory_space<vmem>>, %arg3: memref<32x128xf32, #tpu.memory_space<vmem>>, %arg4: memref<128x128xbf16, #tpu.memory_space<vmem>>) attributes {dimension_semantics = [#tpu.dimension_semantics<parallel>], iteration_bounds = array<i64: 1>, scalar_prefetch = 1 : i64, scratch_operands = 0 : i64, tpu.core_type = #tpu.core_type<tc>, window_params = [{transform_indices = @transform_0, window_bounds = array<i64: 128, 32>}, {pipeline_mode = #tpu.pipeline_mode<synchronous>, transform_indices = @transform_1, window_bounds = array<i64: 32, 128>}, {transform_indices = @transform_2, window_bounds = array<i64: 128, 128>}]} {
    %c0 = arith.constant 0 : index
    %c0_0 = arith.constant 0 : index
    %0 = vector.load %arg2[%c0, %c0_0] : memref<128x32xf32, #tpu.memory_space<vmem>>, vector<128x32xf32>
    %c0_1 = arith.constant 0 : index
    %c0_2 = arith.constant 0 : index
    %1 = vector.load %arg3[%c0_1, %c0_2] : memref<32x128xf32, #tpu.memory_space<vmem>>, vector<32x128xf32>
    %cst = arith.constant dense<0.000000e+00> : vector<128x128xf32>
    %2 = tpu.matmul %0, %1, %cst {dimension_numbers = #tpu.dot_dimension_numbers<[1], [0], [0], [1], [0, 0, 1, 1], [], []>} : vector<128x32xf32>, vector<32x128xf32>, vector<128x128xf32> -> vector<128x128xf32>
    %3 = arith.truncf %2 : vector<128x128xf32> to vector<128x128xbf16>
    %c0_3 = arith.constant 0 : index
    %c0_4 = arith.constant 0 : index
    %4 = vector.load %arg4[%c0_3, %c0_4] : memref<128x128xbf16, #tpu.memory_space<vmem>>, vector<128x128xbf16>
    tpu.vector_store %arg4[%c0_3, %c0_4], %3 {strides = array<i32>} : memref<128x128xbf16, #tpu.memory_space<vmem>>, vector<128x128xbf16>,
    return
  }
  func.func @transform_0(%arg0: i32, %arg1: memref<1xi32, #tpu.memory_space<smem>>) -> (i32, i32) {
    %c0_i32 = arith.constant 0 : i32
    %c0_i32_0 = arith.constant 0 : i32
    return %arg0, %c0_i32 : i32, i32
  }
  func.func @transform_1(%arg0: i32, %arg1: memref<1xi32, #tpu.memory_space<smem>>) -> (i32, i32) {
    %c0_i32 = arith.constant 0 : i32
    %c0_i32_0 = arith.constant 0 : i32
    %c0_i32_1 = arith.constant 0 : i32
    return %c0_i32, %c0_i32_0 : i32, i32
  }
  func.func @transform_2(%arg0: i32, %arg1: memref<1xi32, #tpu.memory_space<smem>>) -> (i32, i32) {
    %c0_i32 = arith.constant 0 : i32
    %c0_i32_0 = arith.constant 0 : i32
    return %arg0, %c0_i32 : i32, i32
  }
}

</mosaic_0001>

<llo_original>
// kernel: tpu_custom_call.1
$region0: #{tpu_custom_call.1}
  #allocation0 [shape = 'u32[]', space=smem, size = 0x4, offset = 0x4, fixed_abs, tag = 'smem constant byte address 0x4 - core index']
  #allocation1 [shape = 'u32[144,128]{1,0:T(1,128)}', space=vmem, size = 0x12000, scoped, tag = 'internal scratch']
  #allocation2 [shape = 's32[1]{0}', space=sflag, size = 0x4, scoped, tag = 'scoped memory for tpu_custom_call.1']
  #allocation3 [shape = 's32[1]{0:T(128)S(6)}', space=smem, size = 0x200, scoped, tag = 'prefetched SMEM operand 0']
  %s0 = inlined_call_operand.<no memory space> [shape: s32[1], index: 0, kind: input, shape index: {}]
  %s1 = inlined_call_operand.vmem [shape: f32[128,32], index: 1, kind: input, shape index: {}]
  %s2 = inlined_call_operand.vmem [shape: f32[32,128], index: 2, kind: input, shape index: {}]
  %s3 = inlined_call_operand.hbm [shape: bf16[128,128], index: 3, kind: output, shape index: {}]
  %s4 = sld [smem:[#allocation0]]
  $region18: #{tpu_custom_call.1} parent=0
    _
  %s6 = ssub.s32 1, %s4
  %s7 = scalar_select 0, %s6, %s4
  %8 = sst [smem:[#allocation3]] %s0
  $region1: #{tpu_custom_call.1} parent=0
    #allocation4 [shape = 'u8[32768]{0}', space=vmem, size = 0x8000, scoped, tag = 'output window, operand 0, single buffered']
    #allocation5 [shape = 's32[1]{0}', space=sflag, size = 0x4, scoped, tag = 'scoped memory for tpu_custom_call.1']
    %9 = vsyncpa [#allocation5], 0
    // Predicated region
    $region2: #{tpu_custom_call.1} parent=1 // pred_check
      _
    $region3: #{tpu_custom_call.1} parent=1 // pred_check_branch
      %11 = sbr.rel (0) target = $region5
    $region4: #{tpu_custom_call.1} parent=1 // pred_region
      _
    $region5: #{tpu_custom_call.1} parent=1 // pred_fallthru
      _
    // Predicated region
    $region6: #{tpu_custom_call.1} parent=1 // pred_check
      _
    $region7: #{tpu_custom_call.1} parent=1 // pred_check_branch
      %13 = sbr.rel (0) target = $region9
    $region8: #{tpu_custom_call.1} parent=1 // pred_region
      _
    $region9: #{tpu_custom_call.1} parent=1 // pred_fallthru
      _
    %v14 = vld [vmem:[%s1] sm:$0xff]
    %v15 = vld [vmem:[%s1 + $0x8] sm:$0xff]
    %v16 = vld [vmem:[%s1 + $0x10] sm:$0xff]
    %v17 = vld [vmem:[%s1 + $0x18] sm:$0xff]
    %v18 = vld [vmem:[%s1 + $0x20] sm:$0xff]
    %v19 = vld [vmem:[%s1 + $0x28] sm:$0xff]
    %v20 = vld [vmem:[%s1 + $0x30] sm:$0xff]
    %v21 = vld [vmem:[%s1 + $0x38] sm:$0xff]
    %v22 = vld [vmem:[%s1 + $0x40] sm:$0xff]
    %v23 = vld [vmem:[%s1 + $0x48] sm:$0xff]
    %v24 = vld [vmem:[%s1 + $0x50] sm:$0xff]
    %v25 = vld [vmem:[%s1 + $0x58] sm:$0xff]
    %v26 = vld [vmem:[%s1 + $0x60] sm:$0xff]
    %v27 = vld [vmem:[%s1 + $0x68] sm:$0xff]
    %v28 = vld [vmem:[%s1 + $0x70] sm:$0xff]
    %v29 = vld [vmem:[%s1 + $0x78] sm:$0xff]
    %v30 = vld [vmem:[%s2] sm:$0xff]
    %v31 = vld [vmem:[%s2 + $0x8] sm:$0xff]
    %v32 = vld [vmem:[%s2 + $0x10] sm:$0xff]
    %v33 = vld [vmem:[%s2 + $0x18] sm:$0xff]
    %vm34 = vcmask 261120
    %v36 = vsel %vm34, %v14, 0
    %v39 = vsel %vm34, %v15, 0
    %v42 = vsel %vm34, %v16, 0
    %v45 = vsel %vm34, %v17, 0
    %v48 = vsel %vm34, %v18, 0
    %v51 = vsel %vm34, %v19, 0
    %v54 = vsel %vm34, %v20, 0
    %v57 = vsel %vm34, %v21, 0
    %v60 = vsel %vm34, %v22, 0
    %v63 = vsel %vm34, %v23, 0
    %v66 = vsel %vm34, %v24, 0
    %v69 = vsel %vm34, %v25, 0
    %v72 = vsel %vm34, %v26, 0
    %v75 = vsel %vm34, %v27, 0
    %v78 = vsel %vm34, %v28, 0
    %v81 = vsel %vm34, %v29, 0
    %83 = vmatprep.subr.mxu0 0.0
    %84 = vmatpush1.msra.mxu0 %v30
    %85 = vmatprep.subr.mxu0 0.0
    %86 = vmatpush1.msra.mxu0 %v31
    %87 = vmatprep.subr.mxu0 0.0
    %88 = vmatpush1.msra.mxu0 %v32
    %89 = vmatprep.subr.mxu0 0.0
    %90 = vmatpush1.msra.mxu0 %v33
    %91 = vmatprep.subr.mxu0 0.0
    %92 = vmatpush1.msra.mxu0 0.0
    %93 = vmatprep.subr.mxu0 0.0
    %94 = vmatpush1.msra.mxu0 0.0
    %95 = vmatprep.subr.mxu0 0.0
    %96 = vmatpush1.msra.mxu0 0.0
    %97 = vmatprep.subr.mxu0 0.0
    %98 = vmatpush1.msra.mxu0 0.0
    %99 = vmatprep.subr.mxu0 0.0
    %100 = vmatpush1.msra.mxu0 0.0
    %101 = vmatprep.subr.mxu0 0.0
    %102 = vmatpush1.msra.mxu0 0.0
    %103 = vmatprep.subr.mxu0 0.0
    %104 = vmatpush1.msra.mxu0 0.0
    %105 = vmatprep.subr.mxu0 0.0
    %106 = vmatpush1.msra.mxu0 0.0
    %107 = vmatprep.subr.mxu0 0.0
    %108 = vmatpush1.msra.mxu0 0.0
    %109 = vmatprep.subr.mxu0 0.0
    %110 = vmatpush1.msra.mxu0 0.0
    %111 = vmatprep.subr.mxu0 0.0
    %112 = vmatpush1.msra.mxu0 0.0
    %113 = vmatprep.subr.mxu0 0.0
    %114 = vmatpush1.msra.mxu0 0.0
    %115 = vmatprep.subr.mxu0 0.0
    %116 = vmatpush1.msra.mxu0 0.0
    %117 = vmatprep.subr.mxu0 0.0
    %118 = vmatpush1.msra.mxu0 0.0
    %119 = vmatprep.subr.mxu0 0.0
    %120 = vmatpush1.msra.mxu0 0.0
    %121 = vmatprep.subr.mxu0 0.0
    %122 = vmatpush1.msra.mxu0 0.0
    %123 = vmatprep.subr.mxu0 0.0
    %124 = vmatpush1.msra.mxu0 0.0
    %125 = vmatprep.subr.mxu0 0.0
    %126 = vmatpush1.msra.mxu0 0.0
    %127 = vmatprep.subr.mxu0 0.0
    %128 = vmatpush1.msra.mxu0 0.0
    %129 = vmatprep.subr.mxu0 0.0
    %130 = vmatpush1.msra.mxu0 0.0
    %131 = vmatprep.subr.mxu0 0.0
    %132 = vmatpush1.msra.mxu0 0.0
    %133 = vmatprep.subr.mxu0 0.0
    %134 = vmatpush1.msra.mxu0 0.0
    %135 = vmatprep.subr.mxu0 0.0
    %136 = vmatpush1.msra.mxu0 0.0
    %137 = vmatprep.subr.mxu0 0.0
    %138 = vmatpush1.msra.mxu0 0.0
    %139 = vmatprep.subr.mxu0 0.0
    %140 = vmatpush1.msra.mxu0 0.0
    %141 = vmatprep.subr.mxu0 0.0
    %142 = vmatpush1.msra.mxu0 0.0
    %143 = vmatprep.subr.mxu0 0.0
    %144 = vmatpush1.msra.mxu0 0.0
    %145 = vmatprep.subr.mxu0 0.0
    %146 = vmatpush1.msra.mxu0 0.0
    %147 = vmatprep.mubr.f32.mxu0 0.0
    %148 = vmatmul.mubr.f32.gmra.mrb[0].mxu0 %v36
    %v149 = vpop.f32.mrb[0].mxu0
    %v150 = vadd.f32 0.0, %v149
    %v151 = vpop.f32.mrb[0].mxu0
    %152 = vmatprep.mubr.f32.mxu0 0.0
    %153 = vmatmul.mubr.f32.gmra.mrb[0].mxu0 %v39
    %v154 = vpop.f32.mrb[0].mxu0
    %v155 = vadd.f32 0.0, %v154
    %v156 = vpop.f32.mrb[0].mxu0
    %157 = vmatprep.mubr.f32.mxu0 0.0
    %158 = vmatmul.mubr.f32.gmra.mrb[0].mxu0 %v42
    %v159 = vpop.f32.mrb[0].mxu0
    %v160 = vadd.f32 0.0, %v159
    %v161 = vpop.f32.mrb[0].mxu0
    %162 = vmatprep.mubr.f32.mxu0 0.0
    %163 = vmatmul.mubr.f32.gmra.mrb[0].mxu0 %v45
    %v164 = vpop.f32.mrb[0].mxu0
    %v165 = vadd.f32 0.0, %v164
    %v166 = vpop.f32.mrb[0].mxu0
    %167 = vmatprep.mubr.f32.mxu0 0.0
    %168 = vmatmul.mubr.f32.gmra.mrb[0].mxu0 %v48
    %v169 = vpop.f32.mrb[0].mxu0
    %v170 = vadd.f32 0.0, %v169
    %v171 = vpop.f32.mrb[0].mxu0
    %172 = vmatprep.mubr.f32.mxu0 0.0
    %173 = vmatmul.mubr.f32.gmra.mrb[0].mxu0 %v51
    %v174 = vpop.f32.mrb[0].mxu0
    %v175 = vadd.f32 0.0, %v174
    %v176 = vpop.f32.mrb[0].mxu0
    %177 = vmatprep.mubr.f32.mxu0 0.0
    %178 = vmatmul.mubr.f32.gmra.mrb[0].mxu0 %v54
    %v179 = vpop.f32.mrb[0].mxu0
    %v180 = vadd.f32 0.0, %v179
    %v181 = vpop.f32.mrb[0].mxu0
    %182 = vmatprep.mubr.f32.mxu0 0.0
    %183 = vmatmul.mubr.f32.gmra.mrb[0].mxu0 %v57
    %v184 = vpop.f32.mrb[0].mxu0
    %v185 = vadd.f32 0.0, %v184
    %v186 = vpop.f32.mrb[0].mxu0
    %187 = vmatprep.mubr.f32.mxu0 0.0
    %188 = vmatmul.mubr.f32.gmra.mrb[0].mxu0 %v60
    %v189 = vpop.f32.mrb[0].mxu0
    %v190 = vadd.f32 0.0, %v189
    %v191 = vpop.f32.mrb[0].mxu0
    %192 = vmatprep.mubr.f32.mxu0 0.0
    %193 = vmatmul.mubr.f32.gmra.mrb[0].mxu0 %v63
    %v194 = vpop.f32.mrb[0].mxu0
    %v195 = vadd.f32 0.0, %v194
    %v196 = vpop.f32.mrb[0].mxu0
    %197 = vmatprep.mubr.f32.mxu0 0.0
    %198 = vmatmul.mubr.f32.gmra.mrb[0].mxu0 %v66
    %v199 = vpop.f32.mrb[0].mxu0
    %v200 = vadd.f32 0.0, %v199
    %v201 = vpop.f32.mrb[0].mxu0
    %202 = vmatprep.mubr.f32.mxu0 0.0
    %203 = vmatmul.mubr.f32.gmra.mrb[0].mxu0 %v69
    %v204 = vpop.f32.mrb[0].mxu0
    %v205 = vadd.f32 0.0, %v204
    %v206 = vpop.f32.mrb[0].mxu0
    %207 = vmatprep.mubr.f32.mxu0 0.0
    %208 = vmatmul.mubr.f32.gmra.mrb[0].mxu0 %v72
    %v209 = vpop.f32.mrb[0].mxu0
    %v210 = vadd.f32 0.0, %v209
    %v211 = vpop.f32.mrb[0].mxu0
    %212 = vmatprep.mubr.f32.mxu0 0.0
    %213 = vmatmul.mubr.f32.gmra.mrb[0].mxu0 %v75
    %v214 = vpop.f32.mrb[0].mxu0
    %v215 = vadd.f32 0.0, %v214
    %v216 = vpop.f32.mrb[0].mxu0
    %217 = vmatprep.mubr.f32.mxu0 0.0
    %218 = vmatmul.mubr.f32.gmra.mrb[0].mxu0 %v78
    %v219 = vpop.f32.mrb[0].mxu0
    %v220 = vadd.f32 0.0, %v219
    %v221 = vpop.f32.mrb[0].mxu0
    %222 = vmatprep.mubr.f32.mxu0 0.0
    %223 = vmatmul.mubr.f32.gmra.mrb[0].mxu0 %v81
    %v224 = vpop.f32.mrb[0].mxu0
    %v225 = vadd.f32 0.0, %v224
    %v226 = vpop.f32.mrb[0].mxu0
    %227 = vdwg.mxu0
    %v228 = vpack.c.bf16 %v155, %v150
    %v229 = vpack.c.bf16 %v165, %v160
    %v230 = vpack.c.bf16 %v175, %v170
    %v231 = vpack.c.bf16 %v185, %v180
    %v232 = vpack.c.bf16 %v195, %v190
    %v233 = vpack.c.bf16 %v205, %v200
    %v234 = vpack.c.bf16 %v215, %v210
    %v235 = vpack.c.bf16 %v225, %v220
    %v244 = vunpack.c.l.b16 %v228
    %v245 = vunpack.c.h.b16 %v228
    %v246 = vunpack.c.l.b16 %v229
    %v247 = vunpack.c.h.b16 %v229
    %v248 = vunpack.c.l.b16 %v230
    %v249 = vunpack.c.h.b16 %v230
    %v250 = vunpack.c.l.b16 %v231
    %v251 = vunpack.c.h.b16 %v231
    %v252 = vunpack.c.l.b16 %v232
    %v253 = vunpack.c.h.b16 %v232
    %v254 = vunpack.c.l.b16 %v233
    %v255 = vunpack.c.h.b16 %v233
    %v256 = vunpack.c.l.b16 %v234
    %v257 = vunpack.c.h.b16 %v234
    %v258 = vunpack.c.l.b16 %v235
    %v259 = vunpack.c.h.b16 %v235
    %v260 = vpack.c.b16 %v244, %v244
    %v261 = vpack.c.b16 %v245, %v245
    %v262 = vpack.c.b16 %v246, %v246
    %v263 = vpack.c.b16 %v247, %v247
    %v264 = vpack.c.b16 %v248, %v248
    %v265 = vpack.c.b16 %v249, %v249
    %v266 = vpack.c.b16 %v250, %v250
    %v267 = vpack.c.b16 %v251, %v251
    %v268 = vpack.c.b16 %v252, %v252
    %v269 = vpack.c.b16 %v253, %v253
    %v270 = vpack.c.b16 %v254, %v254
    %v271 = vpack.c.b16 %v255, %v255
    %v272 = vpack.c.b16 %v256, %v256
    %v273 = vpack.c.b16 %v257, %v257
    %v274 = vpack.c.b16 %v258, %v258
    %v275 = vpack.c.b16 %v259, %v259
    %292 = vst [vmem:[#allocation4] sm:$0xf] %v260
    %293 = vst [vmem:[#allocation4 + $0x4] sm:$0xf] %v261
    %294 = vst [vmem:[#allocation4 + $0x8] sm:$0xf] %v262
    %295 = vst [vmem:[#allocation4 + $0xc] sm:$0xf] %v263
    %296 = vst [vmem:[#allocation4 + $0x10] sm:$0xf] %v264
    %297 = vst [vmem:[#allocation4 + $0x14] sm:$0xf] %v265
    %298 = vst [vmem:[#allocation4 + $0x18] sm:$0xf] %v266
    %299 = vst [vmem:[#allocation4 + $0x1c] sm:$0xf] %v267
    %300 = vst [vmem:[#allocation4 + $0x20] sm:$0xf] %v268
    %301 = vst [vmem:[#allocation4 + $0x24] sm:$0xf] %v269
    %302 = vst [vmem:[#allocation4 + $0x28] sm:$0xf] %v270
    %303 = vst [vmem:[#allocation4 + $0x2c] sm:$0xf] %v271
    %304 = vst [vmem:[#allocation4 + $0x30] sm:$0xf] %v272
    %305 = vst [vmem:[#allocation4 + $0x34] sm:$0xf] %v273
    %306 = vst [vmem:[#allocation4 + $0x38] sm:$0xf] %v274
    %307 = vst [vmem:[#allocation4 + $0x3c] sm:$0xf] %v275
    // Predicated region
    $region10: #{tpu_custom_call.1} parent=1 // pred_check
      _
    $region11: #{tpu_custom_call.1} parent=1 // pred_check_branch
      %309 = sbr.rel (0) target = $region13
    $region12: #{tpu_custom_call.1} parent=1 // pred_region
      %s311 = ssub.s32 1024, 1024
      %312 = vsyncadd [#allocation5], %s311
      %s313 = sshll.u32 [#allocation4], 4
      %s314 = int_to_ptr.vmem [resolvable:$true] %s313
      %319 = dma.vmem_to_hbm [thread:$0]  %s314, 1024, %s3, [#allocation5], 64, 64, 4
    $region13: #{tpu_custom_call.1} parent=1 // pred_fallthru
      _
    // Predicated region
    $region14: #{tpu_custom_call.1} parent=1 // pred_check
      _
    $region15: #{tpu_custom_call.1} parent=1 // pred_check_branch
      %321 = sbr.rel (0) target = $region17
    $region16: #{tpu_custom_call.1} parent=1 // pred_region
      %322 = dma.done [#allocation5], 1024
    $region17: #{tpu_custom_call.1} parent=1 // pred_fallthru
      _
    %323 = vsyncpa [#allocation5], 1

</llo_original>
